<compile_context>
chip_gen: v7x
topology: tpu7x:2x2x1
jax: 0.10.0
libtpu: 0.0.40
codegen_flags: <defaults>
</compile_context>

<pallas_src>
import functools

import jax
import jax.numpy as jnp
import numpy as np
from jax.experimental import pallas as pl
from jax.experimental.pallas import tpu as pltpu


def _bilstm_kernel(
    xg_f_ref,   # (T, bB, 4H) f32   precomputed x@W_ih_fwd + b_fwd (time-major)
    xg_b_ref,   # (T, bB, 4H) f32   precomputed x@W_ih_bwd + b_bwd
    len_ref,    # (bB, 1)     i32
    h0f_ref,    # (bB, H)     f32
    c0f_ref,    # (bB, H)     f32
    h0b_ref,    # (bB, H)     f32
    c0b_ref,    # (bB, H)     f32
    whh_f_ref,  # (H, 4H)     f32   = W_hh_fwd.T
    whh_b_ref,  # (H, 4H)     f32   = W_hh_bwd.T
    hsf_ref,    # out (T, bB, H) f32  forward hidden states (0 at padding)
    hsb_ref,    # out (T, bB, H) f32  backward hidden states (0 at padding)
):
    T = xg_f_ref.shape[0]
    H = h0f_ref.shape[1]

    # Hoist loop-invariant reads: weights + lengths stay register/VMEM-resident.
    lengths = len_ref[...]         # (bB, 1) int32
    whh_f = whh_f_ref[...]         # (H, 4H)
    whh_b = whh_b_ref[...]         # (H, 4H)

    def cell(h, c, pre, whh):
        # Only the recurrent matmul remains on the serial path.
        gates = pre + jnp.dot(h, whh, preferred_element_type=jnp.float32)
        # Activations on the whole (bB, 4H) vreg (EUP slot has slack), then slice.
        sg = jax.nn.sigmoid(gates)
        th = jnp.tanh(gates)
        i = sg[:, 0 * H:1 * H]
        f = sg[:, 1 * H:2 * H]
        g = th[:, 2 * H:3 * H]
        o = sg[:, 3 * H:4 * H]
        c_new = f * c + i * g
        h_new = o * jnp.tanh(c_new)
        return h_new, c_new

    # Fused forward/backward recurrence: two independent chains per iteration.
    def body(k, carry):
        hf, cf, hb, cb = carry

        # ---- forward direction at t = k ----
        t_f = k
        hf_new, cf_new = cell(hf, cf, xg_f_ref[t_f], whh_f)
        act_f = t_f < lengths                         # (bB, 1) bool
        hsf_ref[t_f] = jnp.where(act_f, hf_new, 0.0)  # padding value 0
        hf = jnp.where(act_f, hf_new, hf)
        cf = jnp.where(act_f, cf_new, cf)

        # ---- backward direction at t = T-1-k ----
        t_b = T - 1 - k
        hb_new, cb_new = cell(hb, cb, xg_b_ref[t_b], whh_b)
        act_b = t_b < lengths
        hsb_ref[t_b] = jnp.where(act_b, hb_new, 0.0)
        hb = jnp.where(act_b, hb_new, hb)
        cb = jnp.where(act_b, cb_new, cb)

        return hf, cf, hb, cb

    jax.lax.fori_loop(
        0, T, body,
        (h0f_ref[...], c0f_ref[...], h0b_ref[...], c0b_ref[...]))


def _pick_batch_block(B, max_bb=512):
    if B <= max_bb:
        return B
    for bb in range(max_bb, 7, -1):
        if B % bb == 0 and bb % 8 == 0:
            return bb
    return B


@functools.partial(jax.jit, static_argnames=("batch_block",))
def bilstm_layer_forward(x_seq, lengths, initial, params, batch_block=None):
    """Pallas implementation of BiLSTMLayer.forward.

    x_seq:    (B, T, D) float32
    lengths:  (B,)      int32
    initial:  tuple (h_0_like, c_0_like), each (num_layers*dirs=2, B, H).
              Note: the reference module uses initial[0] for BOTH h_0 and c_0.
    returns:  (B, T, C) logits
    """
    B, T, D = x_seq.shape
    H = params["w_hh_f"].shape[1]
    C = params["w_mlp"].shape[0]

    # sort_tensor + invert_order are identity on the final output ordering;
    # per-sequence lengths are handled by masking inside the kernel.
    init0 = initial[0]                 # used for both h_0 and c_0 (as in reference)
    h0f, h0b = init0[0], init0[1]
    c0f, c0b = init0[0], init0[1]

    # --- Hoisted input projection: one big MXU matmul over (B*T, D) x (D, 8H),
    #     with the (B,T)->(T,B) transpose fused into the matmul output layout.
    w_ih_all = jnp.concatenate(
        [params["w_ih_f"].T, params["w_ih_b"].T], axis=1)             # (D, 8H)
    b_all = jnp.concatenate(
        [params["b_ih_f"] + params["b_hh_f"],
         params["b_ih_b"] + params["b_hh_b"]], axis=0)                # (8H,)
    xg_all = jnp.einsum("btd,dg->tbg", x_seq, w_ih_all,
                        preferred_element_type=jnp.float32) + b_all   # (T, B, 8H)
    xg_f = xg_all[..., : 4 * H]
    xg_b = xg_all[..., 4 * H:]

    whh_f = params["w_hh_f"].T          # (H, 4H)
    whh_b = params["w_hh_b"].T          # (H, 4H)
    len2d = lengths.reshape(B, 1).astype(jnp.int32)

    bB = _pick_batch_block(B) if batch_block is None else batch_block
    assert B % bB == 0
    grid = (B // bB,)

    # Explicit VMEM budget (v7x has 64 MiB physical; scoped default is 32 MiB).
    tile_bytes = 4 * (
        2 * (2 * T * bB * 4 * H)    # xg_f + xg_b, double-buffered
        + 2 * (2 * T * bB * H)      # hsf + hsb outputs, double-buffered
        + 2 * (4 * bB * H)          # initial states
        + 2 * (2 * H * 4 * H)       # recurrent weights
        + 2 * (bB * 1)              # lengths
    )
    vmem_limit = int(min(max(2 * tile_bytes, 4 * 1024 * 1024), 48 * 1024 * 1024))

    hsf, hsb = pl.pallas_call(
        _bilstm_kernel,
        out_shape=(
            jax.ShapeDtypeStruct((T, B, H), jnp.float32),
            jax.ShapeDtypeStruct((T, B, H), jnp.float32),
        ),
        grid=grid,
        in_specs=[
            pl.BlockSpec((T, bB, 4 * H), lambda b: (0, b, 0)),   # xg_f
            pl.BlockSpec((T, bB, 4 * H), lambda b: (0, b, 0)),   # xg_b
            pl.BlockSpec((bB, 1), lambda b: (b, 0)),             # lengths
            pl.BlockSpec((bB, H), lambda b: (b, 0)),             # h0f
            pl.BlockSpec((bB, H), lambda b: (b, 0)),             # c0f
            pl.BlockSpec((bB, H), lambda b: (b, 0)),             # h0b
            pl.BlockSpec((bB, H), lambda b: (b, 0)),             # c0b
            pl.BlockSpec((H, 4 * H), lambda b: (0, 0)),          # whh_f
            pl.BlockSpec((H, 4 * H), lambda b: (0, 0)),          # whh_b
        ],
        out_specs=(
            pl.BlockSpec((T, bB, H), lambda b: (0, b, 0)),
            pl.BlockSpec((T, bB, H), lambda b: (0, b, 0)),
        ),
        compiler_params=pltpu.CompilerParams(
            dimension_semantics=("parallel",),
            vmem_limit_bytes=vmem_limit,
        ),
    )(xg_f, xg_b, len2d, h0f, c0f, h0b, c0b, whh_f, whh_b)

    # --- Hoisted MLP: one big batched matmul per direction, transpose fused
    #     into the output ((T,B,*) -> (B,T,C)).  Padded positions are 0 in
    #     hsf/hsb, so their logits are exactly b_mlp (matches reference).
    w_mlp_t = params["w_mlp"].T                       # (2H, C)
    logits = (
        jnp.einsum("tbh,hc->btc", hsf, w_mlp_t[:H],
                   preferred_element_type=jnp.float32)
        + jnp.einsum("tbh,hc->btc", hsb, w_mlp_t[H:],
                     preferred_element_type=jnp.float32)
        + params["b_mlp"]
    )
    return logits


def _reference_numpy(x_seq, lengths, initial, params):
    """Pure-numpy reference with identical packed-sequence semantics."""
    def sig(v):
        return 1.0 / (1.0 + np.exp(-v))

    x = np.asarray(x_seq, np.float64)
    B, T, D = x.shape
    H = params["w_hh_f"].shape[1]
    init0 = np.asarray(initial[0], np.float64)
    out = np.zeros((B, T, 2 * H), np.float64)

    def run_dir(b, w_ih, w_hh, b_ih, b_hh, h0, c0, reverse):
        L = int(lengths[b])
        h, c = h0.copy(), c0.copy()
        ts = range(L - 1, -1, -1) if reverse else range(L)
        hs = {}
        for t in ts:
            g = x[b, t] @ w_ih.T + h @ w_hh.T + b_ih + b_hh
            i, f, gg, o = g[0:H], g[H:2*H], g[2*H:3*H], g[3*H:4*H]
            c = sig(f) * c + sig(i) * np.tanh(gg)
            h = sig(o) * np.tanh(c)
            hs[t] = h.copy()
        return hs

    for b in range(B):
        hs_f = run_dir(b, np.asarray(params["w_ih_f"], np.float64),
                       np.asarray(params["w_hh_f"], np.float64),
                       np.asarray(params["b_ih_f"], np.float64),
                       np.asarray(params["b_hh_f"], np.float64),
                       init0[0, b], init0[0, b], reverse=False)
        hs_b = run_dir(b, np.asarray(params["w_ih_b"], np.float64),
                       np.asarray(params["w_hh_b"], np.float64),
                       np.asarray(params["b_ih_b"], np.float64),
                       np.asarray(params["b_hh_b"], np.float64),
                       init0[1, b], init0[1, b], reverse=True)
        for t in range(int(lengths[b])):
            out[b, t, :H] = hs_f[t]
            out[b, t, H:] = hs_b[t]
    logits = out @ np.asarray(params["w_mlp"], np.float64).T \
        + np.asarray(params["b_mlp"], np.float64)
    return logits


if __name__ == "__main__":
    B, T, D, H, C = 2, 8, 32, 32, 16   # lstm: input_size=D, hidden=H, bidirectional; mlp: 2H -> C

    key = jax.random.PRNGKey(0)
    ks = jax.random.split(key, 13)
    scale = 1.0 / float(np.sqrt(H))

    def u(k, shape):
        return jax.random.uniform(k, shape, jnp.float32, -scale, scale)

    params = {
        "w_ih_f": u(ks[0], (4 * H, D)), "w_hh_f": u(ks[1], (4 * H, H)),
        "b_ih_f": u(ks[2], (4 * H,)),   "b_hh_f": u(ks[3], (4 * H,)),
        "w_ih_b": u(ks[4], (4 * H, D)), "w_hh_b": u(ks[5], (4 * H, H)),
        "b_ih_b": u(ks[6], (4 * H,)),   "b_hh_b": u(ks[7], (4 * H,)),
        "w_mlp": u(ks[8], (C, 2 * H)),  "b_mlp": u(ks[9], (C,)),
    }

    x_seq = jax.random.normal(ks[10], (B, T, D), jnp.float32)
    initial_h = jax.random.normal(ks[11], (2, B, H), jnp.float32)  # (layers*dirs, B, H)
    initial = (initial_h, initial_h)
    lengths = jnp.array([T, 5], jnp.int32)

    logits = bilstm_layer_forward(x_seq, lengths, initial, params)
    logits = jax.block_until_ready(logits)

    assert logits.shape == (B, T, C), logits.shape
    assert bool(jnp.all(jnp.isfinite(logits)))

    ref = _reference_numpy(np.asarray(x_seq), np.asarray(lengths), initial, params)
    np.testing.assert_allclose(np.asarray(logits), ref, rtol=2e-3, atol=2e-3)

    print("KERNEL_OK")
</pallas_src>

<mosaic_0001>
module attributes {stable_mosaic.version = 11 : i64} {
  func.func @_bilstm_kernel(%arg0: i32, %arg1: memref<8x2x128xf32, #tpu.memory_space<vmem>>, %arg2: memref<8x2x128xf32, #tpu.memory_space<vmem>>, %arg3: memref<2x1xi32, #tpu.memory_space<vmem>>, %arg4: memref<2x32xf32, #tpu.memory_space<vmem>>, %arg5: memref<2x32xf32, #tpu.memory_space<vmem>>, %arg6: memref<2x32xf32, #tpu.memory_space<vmem>>, %arg7: memref<2x32xf32, #tpu.memory_space<vmem>>, %arg8: memref<32x128xf32, #tpu.memory_space<vmem>>, %arg9: memref<32x128xf32, #tpu.memory_space<vmem>>, %arg10: memref<8x2x32xf32, #tpu.memory_space<vmem>>, %arg11: memref<8x2x32xf32, #tpu.memory_space<vmem>>) attributes {dimension_semantics = [#tpu.dimension_semantics<parallel>], iteration_bounds = array<i64: 1>, scalar_prefetch = 0 : i64, scratch_operands = 0 : i64, tpu.core_type = #tpu.core_type<tc>, window_params = [{transform_indices = @transform_0, window_bounds = array<i64: 8, 2, 128>}, {transform_indices = @transform_1, window_bounds = array<i64: 8, 2, 128>}, {transform_indices = @transform_2, window_bounds = array<i64: 2, 1>}, {transform_indices = @transform_3, window_bounds = array<i64: 2, 32>}, {transform_indices = @transform_4, window_bounds = array<i64: 2, 32>}, {transform_indices = @transform_5, window_bounds = array<i64: 2, 32>}, {transform_indices = @transform_6, window_bounds = array<i64: 2, 32>}, {pipeline_mode = #tpu.pipeline_mode<synchronous>, transform_indices = @transform_7, window_bounds = array<i64: 32, 128>}, {pipeline_mode = #tpu.pipeline_mode<synchronous>, transform_indices = @transform_8, window_bounds = array<i64: 32, 128>}, {transform_indices = @transform_9, window_bounds = array<i64: 8, 2, 32>}, {transform_indices = @transform_10, window_bounds = array<i64: 8, 2, 32>}]} {
    %c0 = arith.constant 0 : index
    %c0_0 = arith.constant 0 : index
    %0 = vector.load %arg3[%c0, %c0_0] : memref<2x1xi32, #tpu.memory_space<vmem>>, vector<2x1xi32>
    %c0_1 = arith.constant 0 : index
    %c0_2 = arith.constant 0 : index
    %1 = vector.load %arg8[%c0_1, %c0_2] : memref<32x128xf32, #tpu.memory_space<vmem>>, vector<32x128xf32>
    %c0_3 = arith.constant 0 : index
    %c0_4 = arith.constant 0 : index
    %2 = vector.load %arg9[%c0_3, %c0_4] : memref<32x128xf32, #tpu.memory_space<vmem>>, vector<32x128xf32>
    %c0_5 = arith.constant 0 : index
    %c0_6 = arith.constant 0 : index
    %3 = vector.load %arg4[%c0_5, %c0_6] : memref<2x32xf32, #tpu.memory_space<vmem>>, vector<2x32xf32>
    %c0_7 = arith.constant 0 : index
    %c0_8 = arith.constant 0 : index
    %4 = vector.load %arg5[%c0_7, %c0_8] : memref<2x32xf32, #tpu.memory_space<vmem>>, vector<2x32xf32>
    %c0_9 = arith.constant 0 : index
    %c0_10 = arith.constant 0 : index
    %5 = vector.load %arg6[%c0_9, %c0_10] : memref<2x32xf32, #tpu.memory_space<vmem>>, vector<2x32xf32>
    %c0_11 = arith.constant 0 : index
    %c0_12 = arith.constant 0 : index
    %6 = vector.load %arg7[%c0_11, %c0_12] : memref<2x32xf32, #tpu.memory_space<vmem>>, vector<2x32xf32>
    %c0_i32 = arith.constant 0 : i32
    %c8_i32 = arith.constant 8 : i32
    %7 = arith.addi %c0_i32, %c8_i32 : i32
    %c1_i32 = arith.constant 1 : i32
    %8:4 = scf.for %arg12 = %c0_i32 to %7 step %c1_i32 iter_args(%arg13 = %3, %arg14 = %4, %arg15 = %5, %arg16 = %6) -> (vector<2x32xf32>, vector<2x32xf32>, vector<2x32xf32>, vector<2x32xf32>)  : i32 {
      %9 = arith.index_cast %arg12 : i32 to index
      %c0_14 = arith.constant 0 : index
      %c0_15 = arith.constant 0 : index
      %10 = vector.load %arg1[%9, %c0_14, %c0_15] : memref<8x2x128xf32, #tpu.memory_space<vmem>>, vector<1x2x128xf32>
      %11 = vector.shape_cast %10 : vector<1x2x128xf32> to vector<2x128xf32>
      %cst = arith.constant dense<0.000000e+00> : vector<2x128xf32>
      %12 = tpu.matmul %arg13, %1, %cst {dimension_numbers = #tpu.dot_dimension_numbers<[1], [0], [0], [1], [0, 0, 1, 1], [], []>} : vector<2x32xf32>, vector<32x128xf32>, vector<2x128xf32> -> vector<2x128xf32>
      %13 = arith.addf %11, %12 : vector<2x128xf32>
      %14 = arith.negf %13 : vector<2x128xf32>
      %15 = math.exp %14 : vector<2x128xf32>
      %cst_16 = arith.constant 1.000000e+00 : f32
      %16 = vector.broadcast %cst_16 : f32 to vector<2x128xf32>
      %17 = arith.addf %16, %15 : vector<2x128xf32>
      %18 = arith.divf %16, %17 : vector<2x128xf32>
      %19 = math.tanh %13 : vector<2x128xf32>
      %20 = vector.extract_strided_slice %18 {offsets = [0, 0], sizes = [2, 32], strides = [1, 1]} : vector<2x128xf32> to vector<2x32xf32>
      %21 = vector.extract_strided_slice %18 {offsets = [0, 32], sizes = [2, 32], strides = [1, 1]} : vector<2x128xf32> to vector<2x32xf32>
      %22 = vector.extract_strided_slice %19 {offsets = [0, 64], sizes = [2, 32], strides = [1, 1]} : vector<2x128xf32> to vector<2x32xf32>
      %23 = vector.extract_strided_slice %18 {offsets = [0, 96], sizes = [2, 32], strides = [1, 1]} : vector<2x128xf32> to vector<2x32xf32>
      %24 = arith.mulf %21, %arg14 : vector<2x32xf32>
      %25 = arith.mulf %20, %22 : vector<2x32xf32>
      %26 = arith.addf %24, %25 : vector<2x32xf32>
      %27 = math.tanh %26 : vector<2x32xf32>
      %28 = arith.mulf %23, %27 : vector<2x32xf32>
      %29 = vector.broadcast %arg12 : i32 to vector<2x1xi32>
      %30 = arith.cmpi slt, %29, %0 : vector<2x1xi32>
      %cst_17 = arith.constant 0.000000e+00 : f32
      %31 = vector.shape_cast %30 : vector<2x1xi1> to vector<2x1xi1>
      %32 = vector.broadcast %31 : vector<2x1xi1> to vector<2x32xi1>
      %33 = vector.broadcast %cst_17 : f32 to vector<2x32xf32>
      %34 = arith.select %32, %28, %33 : vector<2x32xi1>, vector<2x32xf32>
      %35 = arith.index_cast %arg12 : i32 to index
      %c0_18 = arith.constant 0 : index
      %c0_19 = arith.constant 0 : index
      %36 = vector.load %arg10[%35, %c0_18, %c0_19] : memref<8x2x32xf32, #tpu.memory_space<vmem>>, vector<1x2x32xf32>
      %37 = vector.shape_cast %36 : vector<1x2x32xf32> to vector<2x32xf32>
      %38 = vector.shape_cast %34 : vector<2x32xf32> to vector<1x2x32xf32>
      tpu.vector_store %arg10[%35, %c0_18, %c0_19], %38 {strides = array<i32>} : memref<8x2x32xf32, #tpu.memory_space<vmem>>, vector<1x2x32xf32>,
      %39 = vector.shape_cast %30 : vector<2x1xi1> to vector<2x1xi1>
      %40 = vector.broadcast %39 : vector<2x1xi1> to vector<2x32xi1>
      %41 = arith.select %40, %28, %arg13 : vector<2x32xi1>, vector<2x32xf32>
      %42 = vector.shape_cast %30 : vector<2x1xi1> to vector<2x1xi1>
      %43 = vector.broadcast %42 : vector<2x1xi1> to vector<2x32xi1>
      %44 = arith.select %43, %26, %arg14 : vector<2x32xi1>, vector<2x32xf32>
      %c7_i32 = arith.constant 7 : i32
      %45 = arith.subi %c7_i32, %arg12 : i32
      %46 = arith.index_cast %45 : i32 to index
      %c0_20 = arith.constant 0 : index
      %c0_21 = arith.constant 0 : index
      %47 = vector.load %arg2[%46, %c0_20, %c0_21] : memref<8x2x128xf32, #tpu.memory_space<vmem>>, vector<1x2x128xf32>
      %48 = vector.shape_cast %47 : vector<1x2x128xf32> to vector<2x128xf32>
      %cst_22 = arith.constant dense<0.000000e+00> : vector<2x128xf32>
      %49 = tpu.matmul %arg15, %2, %cst_22 {dimension_numbers = #tpu.dot_dimension_numbers<[1], [0], [0], [1], [0, 0, 1, 1], [], []>} : vector<2x32xf32>, vector<32x128xf32>, vector<2x128xf32> -> vector<2x128xf32>
      %50 = arith.addf %48, %49 : vector<2x128xf32>
      %51 = arith.negf %50 : vector<2x128xf32>
      %52 = math.exp %51 : vector<2x128xf32>
      %cst_23 = arith.constant 1.000000e+00 : f32
      %53 = vector.broadcast %cst_23 : f32 to vector<2x128xf32>
      %54 = arith.addf %53, %52 : vector<2x128xf32>
      %55 = arith.divf %53, %54 : vector<2x128xf32>
      %56 = math.tanh %50 : vector<2x128xf32>
      %57 = vector.extract_strided_slice %55 {offsets = [0, 0], sizes = [2, 32], strides = [1, 1]} : vector<2x128xf32> to vector<2x32xf32>
      %58 = vector.extract_strided_slice %55 {offsets = [0, 32], sizes = [2, 32], strides = [1, 1]} : vector<2x128xf32> to vector<2x32xf32>
      %59 = vector.extract_strided_slice %56 {offsets = [0, 64], sizes = [2, 32], strides = [1, 1]} : vector<2x128xf32> to vector<2x32xf32>
      %60 = vector.extract_strided_slice %55 {offsets = [0, 96], sizes = [2, 32], strides = [1, 1]} : vector<2x128xf32> to vector<2x32xf32>
      %61 = arith.mulf %58, %arg16 : vector<2x32xf32>
      %62 = arith.mulf %57, %59 : vector<2x32xf32>
      %63 = arith.addf %61, %62 : vector<2x32xf32>
      %64 = math.tanh %63 : vector<2x32xf32>
      %65 = arith.mulf %60, %64 : vector<2x32xf32>
      %66 = vector.broadcast %45 : i32 to vector<2x1xi32>
      %67 = arith.cmpi slt, %66, %0 : vector<2x1xi32>
      %cst_24 = arith.constant 0.000000e+00 : f32
      %68 = vector.shape_cast %67 : vector<2x1xi1> to vector<2x1xi1>
      %69 = vector.broadcast %68 : vector<2x1xi1> to vector<2x32xi1>
      %70 = vector.broadcast %cst_24 : f32 to vector<2x32xf32>
      %71 = arith.select %69, %65, %70 : vector<2x32xi1>, vector<2x32xf32>
      %72 = arith.index_cast %45 : i32 to index
      %c0_25 = arith.constant 0 : index
      %c0_26 = arith.constant 0 : index
      %73 = vector.load %arg11[%72, %c0_25, %c0_26] : memref<8x2x32xf32, #tpu.memory_space<vmem>>, vector<1x2x32xf32>
      %74 = vector.shape_cast %73 : vector<1x2x32xf32> to vector<2x32xf32>
      %75 = vector.shape_cast %71 : vector<2x32xf32> to vector<1x2x32xf32>
      tpu.vector_store %arg11[%72, %c0_25, %c0_26], %75 {strides = array<i32>} : memref<8x2x32xf32, #tpu.memory_space<vmem>>, vector<1x2x32xf32>,
      %76 = vector.shape_cast %67 : vector<2x1xi1> to vector<2x1xi1>
      %77 = vector.broadcast %76 : vector<2x1xi1> to vector<2x32xi1>
      %78 = arith.select %77, %65, %arg15 : vector<2x32xi1>, vector<2x32xf32>
      %79 = vector.shape_cast %67 : vector<2x1xi1> to vector<2x1xi1>
      %80 = vector.broadcast %79 : vector<2x1xi1> to vector<2x32xi1>
      %81 = arith.select %80, %63, %arg16 : vector<2x32xi1>, vector<2x32xf32>
      scf.yield %41, %44, %78, %81 : vector<2x32xf32>, vector<2x32xf32>, vector<2x32xf32>, vector<2x32xf32>
    }
    %c8_i32_13 = arith.constant 8 : i32
    return
  }
  func.func @transform_0(%arg0: i32) -> (i32, i32, i32) {
    %c0_i32 = arith.constant 0 : i32
    %c0_i32_0 = arith.constant 0 : i32
    %c0_i32_1 = arith.constant 0 : i32
    return %c0_i32, %arg0, %c0_i32_0 : i32, i32, i32
  }
  func.func @transform_1(%arg0: i32) -> (i32, i32, i32) {
    %c0_i32 = arith.constant 0 : i32
    %c0_i32_0 = arith.constant 0 : i32
    %c0_i32_1 = arith.constant 0 : i32
    return %c0_i32, %arg0, %c0_i32_0 : i32, i32, i32
  }
  func.func @transform_2(%arg0: i32) -> (i32, i32) {
    %c0_i32 = arith.constant 0 : i32
    %c0_i32_0 = arith.constant 0 : i32
    return %arg0, %c0_i32 : i32, i32
  }
  func.func @transform_3(%arg0: i32) -> (i32, i32) {
    %c0_i32 = arith.constant 0 : i32
    %c0_i32_0 = arith.constant 0 : i32
    return %arg0, %c0_i32 : i32, i32
  }
  func.func @transform_4(%arg0: i32) -> (i32, i32) {
    %c0_i32 = arith.constant 0 : i32
    %c0_i32_0 = arith.constant 0 : i32
    return %arg0, %c0_i32 : i32, i32
  }
  func.func @transform_5(%arg0: i32) -> (i32, i32) {
    %c0_i32 = arith.constant 0 : i32
    %c0_i32_0 = arith.constant 0 : i32
    return %arg0, %c0_i32 : i32, i32
  }
  func.func @transform_6(%arg0: i32) -> (i32, i32) {
    %c0_i32 = arith.constant 0 : i32
    %c0_i32_0 = arith.constant 0 : i32
    return %arg0, %c0_i32 : i32, i32
  }
  func.func @transform_7(%arg0: i32) -> (i32, i32) {
    %c0_i32 = arith.constant 0 : i32
    %c0_i32_0 = arith.constant 0 : i32
    %c0_i32_1 = arith.constant 0 : i32
    return %c0_i32, %c0_i32_0 : i32, i32
  }
  func.func @transform_8(%arg0: i32) -> (i32, i32) {
    %c0_i32 = arith.constant 0 : i32
    %c0_i32_0 = arith.constant 0 : i32
    %c0_i32_1 = arith.constant 0 : i32
    return %c0_i32, %c0_i32_0 : i32, i32
  }
  func.func @transform_9(%arg0: i32) -> (i32, i32, i32) {
    %c0_i32 = arith.constant 0 : i32
    %c0_i32_0 = arith.constant 0 : i32
    %c0_i32_1 = arith.constant 0 : i32
    return %c0_i32, %arg0, %c0_i32_0 : i32, i32, i32
  }
  func.func @transform_10(%arg0: i32) -> (i32, i32, i32) {
    %c0_i32 = arith.constant 0 : i32
    %c0_i32_0 = arith.constant 0 : i32
    %c0_i32_1 = arith.constant 0 : i32
    return %c0_i32, %arg0, %c0_i32_0 : i32, i32, i32
  }
}

</mosaic_0001>

<llo_original>
// kernel: bilstm_layer_forward.1
$region0: #{bilstm_layer_forward.1}
  #allocation0 [shape = 'u32[]', space=smem, size = 0x4, offset = 0x4, fixed_abs, tag = 'smem constant byte address 0x4 - core index']
  #allocation1 [shape = 'u32[144,128]{1,0:T(1,128)}', space=vmem, size = 0x12000, scoped, tag = 'internal scratch']
  %s0 = inlined_call_operand.vmem [shape: f32[8,2,128], index: 0, kind: input, shape index: {}]
  %s1 = inlined_call_operand.vmem [shape: f32[8,2,128], index: 1, kind: input, shape index: {}]
  %s2 = inlined_call_operand.vmem [shape: s32[2,1], index: 2, kind: input, shape index: {}]
  %s3 = inlined_call_operand.vmem [shape: f32[2,32], index: 3, kind: input, shape index: {}, may-alias: {3,4}]
  %s4 = inlined_call_operand.vmem [shape: f32[2,32], index: 4, kind: input, shape index: {}, may-alias: {3,4}]
  %s5 = inlined_call_operand.vmem [shape: f32[2,32], index: 5, kind: input, shape index: {}, may-alias: {5,6}]
  %s6 = inlined_call_operand.vmem [shape: f32[2,32], index: 6, kind: input, shape index: {}, may-alias: {5,6}]
  %s7 = inlined_call_operand.vmem [shape: f32[32,128], index: 7, kind: input, shape index: {}]
  %s8 = inlined_call_operand.vmem [shape: f32[32,128], index: 8, kind: input, shape index: {}]
  %s9 = inlined_call_operand.vmem [shape: f32[8,2,32], index: 9, kind: output, shape index: {0}]
  %s10 = inlined_call_operand.vmem [shape: f32[8,2,32], index: 10, kind: output, shape index: {1}]
  %11 = xla_tuple %s9, %s10
  %s12 = sld [smem:[#allocation0]]
  $region61: #{bilstm_layer_forward.1} parent=0
    _
  %s14 = ssub.s32 1, %s12
  %s15 = scalar_select 0, %s14, %s12
  // Predicated region
  $region2: #{bilstm_layer_forward.1} parent=0 // pred_check
    _
  $region3: #{bilstm_layer_forward.1} parent=0 // pred_check_branch
    %17 = sbr.rel (0) target = $region5
  $region4: #{bilstm_layer_forward.1} parent=0 // pred_region
    _
  $region5: #{bilstm_layer_forward.1} parent=0 // pred_fallthru
    _
  // Predicated region
  $region6: #{bilstm_layer_forward.1} parent=0 // pred_check
    _
  $region7: #{bilstm_layer_forward.1} parent=0 // pred_check_branch
    %19 = sbr.rel (0) target = $region9
  $region8: #{bilstm_layer_forward.1} parent=0 // pred_region
    _
  $region9: #{bilstm_layer_forward.1} parent=0 // pred_fallthru
    _
  // Predicated region
  $region10: #{bilstm_layer_forward.1} parent=0 // pred_check
    _
  $region11: #{bilstm_layer_forward.1} parent=0 // pred_check_branch
    %21 = sbr.rel (0) target = $region13
  $region12: #{bilstm_layer_forward.1} parent=0 // pred_region
    _
  $region13: #{bilstm_layer_forward.1} parent=0 // pred_fallthru
    _
  // Predicated region
  $region14: #{bilstm_layer_forward.1} parent=0 // pred_check
    _
  $region15: #{bilstm_layer_forward.1} parent=0 // pred_check_branch
    %23 = sbr.rel (0) target = $region17
  $region16: #{bilstm_layer_forward.1} parent=0 // pred_region
    _
  $region17: #{bilstm_layer_forward.1} parent=0 // pred_fallthru
    _
  // Predicated region
  $region18: #{bilstm_layer_forward.1} parent=0 // pred_check
    _
  $region19: #{bilstm_layer_forward.1} parent=0 // pred_check_branch
    %25 = sbr.rel (0) target = $region21
  $region20: #{bilstm_layer_forward.1} parent=0 // pred_region
    _
  $region21: #{bilstm_layer_forward.1} parent=0 // pred_fallthru
    _
  // Predicated region
  $region22: #{bilstm_layer_forward.1} parent=0 // pred_check
    _
  $region23: #{bilstm_layer_forward.1} parent=0 // pred_check_branch
    %27 = sbr.rel (0) target = $region25
  $region24: #{bilstm_layer_forward.1} parent=0 // pred_region
    _
  $region25: #{bilstm_layer_forward.1} parent=0 // pred_fallthru
    _
  // Predicated region
  $region26: #{bilstm_layer_forward.1} parent=0 // pred_check
    _
  $region27: #{bilstm_layer_forward.1} parent=0 // pred_check_branch
    %29 = sbr.rel (0) target = $region29
  $region28: #{bilstm_layer_forward.1} parent=0 // pred_region
    _
  $region29: #{bilstm_layer_forward.1} parent=0 // pred_fallthru
    _
  // Predicated region
  $region30: #{bilstm_layer_forward.1} parent=0 // pred_check
    _
  $region31: #{bilstm_layer_forward.1} parent=0 // pred_check_branch
    %31 = sbr.rel (0) target = $region33
  $region32: #{bilstm_layer_forward.1} parent=0 // pred_region
    _
  $region33: #{bilstm_layer_forward.1} parent=0 // pred_fallthru
    _
  // Predicated region
  $region34: #{bilstm_layer_forward.1} parent=0 // pred_check
    _
  $region35: #{bilstm_layer_forward.1} parent=0 // pred_check_branch
    %33 = sbr.rel (0) target = $region37
  $region36: #{bilstm_layer_forward.1} parent=0 // pred_region
    _
  $region37: #{bilstm_layer_forward.1} parent=0 // pred_fallthru
    _
  %v34 = vld [vmem:[%s2] sm:$0x3]
  %v35 = vld [vmem:[%s7] sm:$0xff]
  %v36 = vld [vmem:[%s7 + $0x8] sm:$0xff]
  %v37 = vld [vmem:[%s7 + $0x10] sm:$0xff]
  %v38 = vld [vmem:[%s7 + $0x18] sm:$0xff]
  %v39 = vld [vmem:[%s8] sm:$0xff]
  %v40 = vld [vmem:[%s8 + $0x8] sm:$0xff]
  %v41 = vld [vmem:[%s8 + $0x10] sm:$0xff]
  %v42 = vld [vmem:[%s8 + $0x18] sm:$0xff]
  %v43 = vld [vmem:[%s3] sm:$0x3]
  %v44 = vld [vmem:[%s4] sm:$0x3]
  %v45 = vld [vmem:[%s5] sm:$0x3]
  %v46 = vld [vmem:[%s6] sm:$0x3]
  loop: start=0, step=1, limit=8
  $region38: #{bilstm_layer_forward.1} parent=0 // loop_pre_header
    _
  $region39: #{bilstm_layer_forward.1} parent=0 // loop_header
    %s48 = sphi 0, %s52
    %p49 = scmp.ge.s32.totalorder %s48, 8
    %v53 = vphi %v43, %v310
    %v54 = vphi %v44, %v314
    %v55 = vphi %v45, %v318
    %v56 = vphi %v46, %v322
  $region40: #{bilstm_layer_forward.1} parent=0 // loop_header_branch
    %51 = sbr.rel (%p49) target = $region44
  $region41: #{bilstm_layer_forward.1} parent=0 // loop_body
    %s57 = smul.u32 %s48, 2
    %s58 = scalar_lea.vmem %s0, %s57
    %v59 = vld [vmem:[%s58] sm:$0x3]
    %vm60 = vcmask 261120
    %v62 = vsel %vm60, %v53, 0
    %64 = vmatprep.subr.mxu0 0.0
    %65 = vmatpush1.msra.mxu0 %v35
    %66 = vmatprep.subr.mxu0 0.0
    %67 = vmatpush1.msra.mxu0 %v36
    %68 = vmatprep.subr.mxu0 0.0
    %69 = vmatpush1.msra.mxu0 %v37
    %70 = vmatprep.subr.mxu0 0.0
    %71 = vmatpush1.msra.mxu0 %v38
    %72 = vmatprep.subr.mxu0 0.0
    %73 = vmatpush1.msra.mxu0 0.0
    %74 = vmatprep.subr.mxu0 0.0
    %75 = vmatpush1.msra.mxu0 0.0
    %76 = vmatprep.subr.mxu0 0.0
    %77 = vmatpush1.msra.mxu0 0.0
    %78 = vmatprep.subr.mxu0 0.0
    %79 = vmatpush1.msra.mxu0 0.0
    %80 = vmatprep.subr.mxu0 0.0
    %81 = vmatpush1.msra.mxu0 0.0
    %82 = vmatprep.subr.mxu0 0.0
    %83 = vmatpush1.msra.mxu0 0.0
    %84 = vmatprep.subr.mxu0 0.0
    %85 = vmatpush1.msra.mxu0 0.0
    %86 = vmatprep.subr.mxu0 0.0
    %87 = vmatpush1.msra.mxu0 0.0
    %88 = vmatprep.subr.mxu0 0.0
    %89 = vmatpush1.msra.mxu0 0.0
    %90 = vmatprep.subr.mxu0 0.0
    %91 = vmatpush1.msra.mxu0 0.0
    %92 = vmatprep.subr.mxu0 0.0
    %93 = vmatpush1.msra.mxu0 0.0
    %94 = vmatprep.subr.mxu0 0.0
    %95 = vmatpush1.msra.mxu0 0.0
    %96 = vmatprep.subr.mxu0 0.0
    %97 = vmatpush1.msra.mxu0 0.0
    %98 = vmatprep.subr.mxu0 0.0
    %99 = vmatpush1.msra.mxu0 0.0
    %100 = vmatprep.subr.mxu0 0.0
    %101 = vmatpush1.msra.mxu0 0.0
    %102 = vmatprep.subr.mxu0 0.0
    %103 = vmatpush1.msra.mxu0 0.0
    %104 = vmatprep.subr.mxu0 0.0
    %105 = vmatpush1.msra.mxu0 0.0
    %106 = vmatprep.subr.mxu0 0.0
    %107 = vmatpush1.msra.mxu0 0.0
    %108 = vmatprep.subr.mxu0 0.0
    %109 = vmatpush1.msra.mxu0 0.0
    %110 = vmatprep.subr.mxu0 0.0
    %111 = vmatpush1.msra.mxu0 0.0
    %112 = vmatprep.subr.mxu0 0.0
    %113 = vmatpush1.msra.mxu0 0.0
    %114 = vmatprep.subr.mxu0 0.0
    %115 = vmatpush1.msra.mxu0 0.0
    %116 = vmatprep.subr.mxu0 0.0
    %117 = vmatpush1.msra.mxu0 0.0
    %118 = vmatprep.subr.mxu0 0.0
    %119 = vmatpush1.msra.mxu0 0.0
    %120 = vmatprep.subr.mxu0 0.0
    %121 = vmatpush1.msra.mxu0 0.0
    %122 = vmatprep.subr.mxu0 0.0
    %123 = vmatpush1.msra.mxu0 0.0
    %124 = vmatprep.subr.mxu0 0.0
    %125 = vmatpush1.msra.mxu0 0.0
    %126 = vmatprep.subr.mxu0 0.0
    %127 = vmatpush1.msra.mxu0 0.0
    %128 = vmatprep.mubr.f32.mxu0 0.0
    %129 = vmatmul.mubr.f32.gmra.mrb[0].mxu0 %v62
    %v130 = vpop.f32.mrb[0].mxu0
    %v131 = vadd.f32 0.0, %v130
    %v132 = vpop.f32.mrb[0].mxu0
    %133 = vdwg.mxu0
    %v134 = vadd.f32 %v59, %v131
    %v135 = vxor.u32 %v134, 2147483648
    %v136 = vmul.f32 %v135, 1.442695
    %v137 = vpow.pop %v136
    %v138 = vadd.f32 %v137, 1.0
    %v139 = vrcp.pop %v138
    %v140 = vmul.f32 1.0, %v139
    %v141 = vtanh.pop %v134
    %143 = vrot.lane.b32.xlu0 %v54, 32
    %v144 = vpop.permute.xlu0 %143
    %v146 = vmul.f32 %v140, %v144
    %148 = vrot.lane.b32.xlu0 %v141, 64
    %v149 = vpop.permute.xlu0 %148
    %v151 = vmul.f32 %v140, %v149
    %153 = vrot.lane.b32.xlu0 %v151, 32
    %v154 = vpop.permute.xlu0 %153
    %v156 = vadd.f32 %v146, %v154
    %v157 = vtanh.pop %v156
    %159 = vrot.lane.b32.xlu0 %v157, 64
    %v160 = vpop.permute.xlu0 %159
    %v162 = vmul.f32 %v140, %v160
    %v163 = vstv %s48
    %vm164 = vcmp.lt.s32.totalorder %v163, %v34
    %v165 = vsel %vm164, 1, 0
    %166 = vset.pattern.permute.xlu0 0
    %167 = vperm.xlu0 %166, %v165
    %v168 = vpop.permute.xlu0 %167
    %vm169 = vcmp.eq.s32.totalorder %v168, 1
    %v170 = vsel %vm169, %v162, 0.0
    %172 = vrot.lane.b32.xlu0 %v170, 32
    %v173 = vpop.permute.xlu0 %172
    %s175 = scalar_lea.vmem %s9, %s57
    %vm176 = vcmask 254976
    %177 = vst.msk [vmem:[%s175] sm:$0x3] %vm176, %v173
    %178 = vrot.lane.b32.xlu0 %v53, 96
    %v179 = vpop.permute.xlu0 %178
    %v181 = vsel %vm169, %v162, %v179
    %v182 = vsel %vm169, %v156, %v144
    %s183 = ssub.s32 7, %s48
    %s184 = smul.u32 %s183, 2
    %s185 = scalar_lea.vmem %s1, %s184
    %v186 = vld [vmem:[%s185] sm:$0x3]
    %v188 = vsel %vm60, %v55, 0
    %190 = vmatprep.subr.mxu0 0.0
    %191 = vmatpush1.msra.mxu0 %v39
    %192 = vmatprep.subr.mxu0 0.0
    %193 = vmatpush1.msra.mxu0 %v40
    %194 = vmatprep.subr.mxu0 0.0
    %195 = vmatpush1.msra.mxu0 %v41
    %196 = vmatprep.subr.mxu0 0.0
    %197 = vmatpush1.msra.mxu0 %v42
    %198 = vmatprep.subr.mxu0 0.0
    %199 = vmatpush1.msra.mxu0 0.0
    %200 = vmatprep.subr.mxu0 0.0
    %201 = vmatpush1.msra.mxu0 0.0
    %202 = vmatprep.subr.mxu0 0.0
    %203 = vmatpush1.msra.mxu0 0.0
    %204 = vmatprep.subr.mxu0 0.0
    %205 = vmatpush1.msra.mxu0 0.0
    %206 = vmatprep.subr.mxu0 0.0
    %207 = vmatpush1.msra.mxu0 0.0
    %208 = vmatprep.subr.mxu0 0.0
    %209 = vmatpush1.msra.mxu0 0.0
    %210 = vmatprep.subr.mxu0 0.0
    %211 = vmatpush1.msra.mxu0 0.0
    %212 = vmatprep.subr.mxu0 0.0
    %213 = vmatpush1.msra.mxu0 0.0
    %214 = vmatprep.subr.mxu0 0.0
    %215 = vmatpush1.msra.mxu0 0.0
    %216 = vmatprep.subr.mxu0 0.0
    %217 = vmatpush1.msra.mxu0 0.0
    %218 = vmatprep.subr.mxu0 0.0
    %219 = vmatpush1.msra.mxu0 0.0
    %220 = vmatprep.subr.mxu0 0.0
    %221 = vmatpush1.msra.mxu0 0.0
    %222 = vmatprep.subr.mxu0 0.0
    %223 = vmatpush1.msra.mxu0 0.0
    %224 = vmatprep.subr.mxu0 0.0
    %225 = vmatpush1.msra.mxu0 0.0
    %226 = vmatprep.subr.mxu0 0.0
    %227 = vmatpush1.msra.mxu0 0.0
    %228 = vmatprep.subr.mxu0 0.0
    %229 = vmatpush1.msra.mxu0 0.0
    %230 = vmatprep.subr.mxu0 0.0
    %231 = vmatpush1.msra.mxu0 0.0
    %232 = vmatprep.subr.mxu0 0.0
    %233 = vmatpush1.msra.mxu0 0.0
    %234 = vmatprep.subr.mxu0 0.0
    %235 = vmatpush1.msra.mxu0 0.0
    %236 = vmatprep.subr.mxu0 0.0
    %237 = vmatpush1.msra.mxu0 0.0
    %238 = vmatprep.subr.mxu0 0.0
    %239 = vmatpush1.msra.mxu0 0.0
    %240 = vmatprep.subr.mxu0 0.0
    %241 = vmatpush1.msra.mxu0 0.0
    %242 = vmatprep.subr.mxu0 0.0
    %243 = vmatpush1.msra.mxu0 0.0
    %244 = vmatprep.subr.mxu0 0.0
    %245 = vmatpush1.msra.mxu0 0.0
    %246 = vmatprep.subr.mxu0 0.0
    %247 = vmatpush1.msra.mxu0 0.0
    %248 = vmatprep.subr.mxu0 0.0
    %249 = vmatpush1.msra.mxu0 0.0
    %250 = vmatprep.subr.mxu0 0.0
    %251 = vmatpush1.msra.mxu0 0.0
    %252 = vmatprep.subr.mxu0 0.0
    %253 = vmatpush1.msra.mxu0 0.0
    %254 = vmatprep.mubr.f32.mxu0 0.0
    %255 = vmatmul.mubr.f32.gmra.mrb[0].mxu0 %v188
    %v256 = vpop.f32.mrb[0].mxu0
    %v257 = vadd.f32 0.0, %v256
    %v258 = vpop.f32.mrb[0].mxu0
    %259 = vdwg.mxu0
    %v260 = vadd.f32 %v186, %v257
    %v261 = vxor.u32 %v260, 2147483648
    %v262 = vmul.f32 %v261, 1.442695
    %v263 = vpow.pop %v262
    %v264 = vadd.f32 %v263, 1.0
    %v265 = vrcp.pop %v264
    %v266 = vmul.f32 1.0, %v265
    %v267 = vtanh.pop %v260
    %269 = vrot.lane.b32.xlu0 %v56, 32
    %v270 = vpop.permute.xlu0 %269
    %v272 = vmul.f32 %v266, %v270
    %274 = vrot.lane.b32.xlu0 %v267, 64
    %v275 = vpop.permute.xlu0 %274
    %v277 = vmul.f32 %v266, %v275
    %279 = vrot.lane.b32.xlu0 %v277, 32
    %v280 = vpop.permute.xlu0 %279
    %v282 = vadd.f32 %v272, %v280
    %v283 = vtanh.pop %v282
    %285 = vrot.lane.b32.xlu0 %v283, 64
    %v286 = vpop.permute.xlu0 %285
    %v288 = vmul.f32 %v266, %v286
    %v289 = vstv %s183
    %vm290 = vcmp.lt.s32.totalorder %v289, %v34
    %v291 = vsel %vm290, 1, 0
    %292 = vset.pattern.permute.xlu0 0
    %293 = vperm.xlu0 %292, %v291
    %v294 = vpop.permute.xlu0 %293
    %vm295 = vcmp.eq.s32.totalorder %v294, 1
    %v296 = vsel %vm295, %v288, 0.0
    %298 = vrot.lane.b32.xlu0 %v296, 32
    %v299 = vpop.permute.xlu0 %298
    %s301 = scalar_lea.vmem %s10, %s184
    %302 = vst.msk [vmem:[%s301] sm:$0x3] %vm176, %v299
    %303 = vrot.lane.b32.xlu0 %v55, 96
    %v304 = vpop.permute.xlu0 %303
    %v306 = vsel %vm295, %v288, %v304
    %v307 = vsel %vm295, %v282, %v270
    %309 = vrot.lane.b32.xlu0 %v181, 32
    %v310 = vpop.permute.xlu0 %309
    %313 = vrot.lane.b32.xlu0 %v182, 96
    %v314 = vpop.permute.xlu0 %313
    %317 = vrot.lane.b32.xlu0 %v306, 32
    %v318 = vpop.permute.xlu0 %317
    %321 = vrot.lane.b32.xlu0 %v307, 96
    %v322 = vpop.permute.xlu0 %321
  $region42: #{bilstm_layer_forward.1} parent=0 // loop_footer
    %s52 = sadd.s32 1, %s48
  $region43: #{bilstm_layer_forward.1} parent=0 // loop_footer_branch
    %47 = sbr.rel target = $region39
  $region44: #{bilstm_layer_forward.1} parent=0 // loop_exit
    _
  // Predicated region
  $region45: #{bilstm_layer_forward.1} parent=0 // pred_check
    _
  $region46: #{bilstm_layer_forward.1} parent=0 // pred_check_branch
    %325 = sbr.rel (0) target = $region48
  $region47: #{bilstm_layer_forward.1} parent=0 // pred_region
    _
  $region48: #{bilstm_layer_forward.1} parent=0 // pred_fallthru
    _
  // Predicated region
  $region49: #{bilstm_layer_forward.1} parent=0 // pred_check
    _
  $region50: #{bilstm_layer_forward.1} parent=0 // pred_check_branch
    %327 = sbr.rel (0) target = $region52
  $region51: #{bilstm_layer_forward.1} parent=0 // pred_region
    _
  $region52: #{bilstm_layer_forward.1} parent=0 // pred_fallthru
    _
  // Predicated region
  $region53: #{bilstm_layer_forward.1} parent=0 // pred_check
    _
  $region54: #{bilstm_layer_forward.1} parent=0 // pred_check_branch
    %329 = sbr.rel (0) target = $region56
  $region55: #{bilstm_layer_forward.1} parent=0 // pred_region
    _
  $region56: #{bilstm_layer_forward.1} parent=0 // pred_fallthru
    _
  // Predicated region
  $region57: #{bilstm_layer_forward.1} parent=0 // pred_check
    _
  $region58: #{bilstm_layer_forward.1} parent=0 // pred_check_branch
    %331 = sbr.rel (0) target = $region60
  $region59: #{bilstm_layer_forward.1} parent=0 // pred_region
    _
  $region60: #{bilstm_layer_forward.1} parent=0 // pred_fallthru
    _

</llo_original>
